<compile_context>
chip_gen: v7x
topology: tpu7x:2x2x1
jax: 0.10.0
libtpu: 0.0.40
codegen_flags: <defaults>
</compile_context>

<pallas_src>
import functools

import jax
import jax.numpy as jnp
from jax.experimental import pallas as pl
from jax.experimental.pallas import tpu as pltpu

_LANES = 128
_SUBLANES = 8


# ----------------------------------------------------------------------------
# Kernels (all purely elementwise on lane-dense (block_rows, 128) tiles)
# ----------------------------------------------------------------------------
def _pade_terms(w_ref, r, *, approx):
    """Return K, dK/dr, d2K/dr2 for the Pade-exp Jastrow kernel."""
    b = w_ref[0]          # w0
    bp = w_ref[1]         # w
    inv = pl.reciprocal(1.0 + bp * r, approx=approx)     # 1 / (1 + w r)  (EUP)
    u = b * r * inv
    k = jnp.exp(u)
    du = b * inv * inv                                    # du/dr
    d2u = -2.0 * bp * du * inv                            # d2u/dr2
    dk = k * du
    d2k = k * (d2u + du * du)
    return k, dk, d2k


def _fwd_kernel(w_ref, r_ref, k_ref, *, approx):
    b = w_ref[0]
    bp = w_ref[1]
    r = r_ref[...]
    inv = pl.reciprocal(1.0 + bp * r, approx=approx)
    k_ref[...] = jnp.exp(b * r * inv)


def _grad_kernel(w_ref, r_ref, dr_ref, g_ref, *, approx):
    _, dk, _ = _pade_terms(w_ref, r_ref[...], approx=approx)
    g_ref[...] = dk[None, :, :] * dr_ref[...]              # (3, bm, 128)


def _hess_kernel(w_ref, r_ref, dr_ref, d2r_ref, h_ref, *, approx):
    _, dk, d2k = _pade_terms(w_ref, r_ref[...], approx=approx)
    dr = dr_ref[...]
    h_ref[...] = d2k[None, :, :] * (dr * dr) + dk[None, :, :] * d2r_ref[...]


def _all_kernel(w_ref, r_ref, dr_ref, d2r_ref, k_ref, g_ref, h_ref, *, approx):
    k, dk, d2k = _pade_terms(w_ref, r_ref[...], approx=approx)
    dr = dr_ref[...]
    k_ref[...] = k
    g_ref[...] = dk[None, :, :] * dr
    h_ref[...] = d2k[None, :, :] * (dr * dr) + dk[None, :, :] * d2r_ref[...]


# ----------------------------------------------------------------------------
# Wrapper
# ----------------------------------------------------------------------------
class JastrowKernelElectronNuclei:
    """JAX/Pallas port of JastrowKernelElectronNucleiBase (Pade-exp kernel)."""

    def __init__(self, nup, ndown, atomic_pos, w0=1.0, w=1.0,
                 max_block_rows=512, approx_reciprocal=True):
        self.nup, self.ndown = nup, ndown
        self.nelec = nup + ndown
        self.atoms = atomic_pos
        self.natoms = atomic_pos.shape[0]
        self.ndim = 3
        self.max_block_rows = int(max_block_rows)   # (512,128) f32 = 256 KiB/stream
        self.approx = bool(approx_reciprocal)
        # variational parameters [w0, w] -> SMEM scalars inside the kernel
        self.weights = jnp.array([w0, w], dtype=jnp.float32)
        # TODO(synk): the torch `cuda` flag has no TPU equivalent; ignored.

    # ----- lane-dense packing helpers ---------------------------------------
    def _layout(self, n_elem):
        rows = max(1, -(-n_elem // _LANES))
        rows = -(-rows // _SUBLANES) * _SUBLANES        # sublane-align
        if rows <= self.max_block_rows:
            return rows, rows                           # single full block
        block = self.max_block_rows
        rows = -(-rows // block) * block                # pad to whole blocks
        return rows, block

    def _pack_r(self, r, rows):
        n = r.shape[0] * r.shape[1] * r.shape[2]
        flat = jnp.ravel(r).astype(jnp.float32)
        flat = jnp.pad(flat, (0, rows * _LANES - n))
        return flat.reshape(rows, _LANES)

    def _pack_vec(self, v, rows):
        # (B, 3, Ne, Na) -> (3, rows, 128), element order matching _pack_r
        n = v.shape[0] * v.shape[2] * v.shape[3]
        flat = jnp.moveaxis(v, 1, 0).reshape(self.ndim, -1).astype(jnp.float32)
        flat = jnp.pad(flat, ((0, 0), (0, rows * _LANES - n)))
        return flat.reshape(self.ndim, rows, _LANES)

    def _unpack_scalar(self, y, shape):
        n = shape[0] * shape[1] * shape[2]
        return y.reshape(-1)[:n].reshape(shape)

    def _unpack_vec(self, y, shape):
        n = shape[0] * shape[1] * shape[2]
        y = y.reshape(self.ndim, -1)[:, :n].reshape(self.ndim, *shape)
        return jnp.moveaxis(y, 0, 1)                    # (B, 3, Ne, Na)

    def _specs(self, rows, block):
        grid = (rows // block,)
        w_spec = pl.BlockSpec(memory_space=pltpu.MemorySpace.SMEM)
        r_spec = pl.BlockSpec((block, _LANES), lambda i: (i, 0))
        v_spec = pl.BlockSpec((self.ndim, block, _LANES), lambda i: (0, i, 0))
        cp = pltpu.CompilerParams(dimension_semantics=("parallel",))
        return grid, w_spec, r_spec, v_spec, cp

    # ----- public API --------------------------------------------------------
    def forward(self, r):
        """out_{b,i,a} = exp( w0 r / (1 + w r) )  -- (B, Ne, Na)."""
        shape = r.shape
        rows, block = self._layout(shape[0] * shape[1] * shape[2])
        grid, w_spec, r_spec, _, cp = self._specs(rows, block)
        out = pl.pallas_call(
            functools.partial(_fwd_kernel, approx=self.approx),
            out_shape=jax.ShapeDtypeStruct((rows, _LANES), jnp.float32),
            grid=grid,
            in_specs=[w_spec, r_spec],
            out_specs=r_spec,
            compiler_params=cp,
        )(self.weights, self._pack_r(r, rows))
        return self._unpack_scalar(out, shape)

    def compute_derivative(self, r, dr):
        """(dK/dr) * dr  -- (B, 3, Ne, Na); broadcast fused in-kernel."""
        shape = r.shape
        rows, block = self._layout(shape[0] * shape[1] * shape[2])
        grid, w_spec, r_spec, v_spec, cp = self._specs(rows, block)
        out = pl.pallas_call(
            functools.partial(_grad_kernel, approx=self.approx),
            out_shape=jax.ShapeDtypeStruct((self.ndim, rows, _LANES), jnp.float32),
            grid=grid,
            in_specs=[w_spec, r_spec, v_spec],
            out_specs=v_spec,
            compiler_params=cp,
        )(self.weights, self._pack_r(r, rows), self._pack_vec(dr, rows))
        return self._unpack_vec(out, shape)

    def compute_second_derivative(self, r, dr, d2r):
        """(d2K/dr2) * dr^2 + (dK/dr) * d2r  -- (B, 3, Ne, Na); fused in-kernel."""
        shape = r.shape
        rows, block = self._layout(shape[0] * shape[1] * shape[2])
        grid, w_spec, r_spec, v_spec, cp = self._specs(rows, block)
        out = pl.pallas_call(
            functools.partial(_hess_kernel, approx=self.approx),
            out_shape=jax.ShapeDtypeStruct((self.ndim, rows, _LANES), jnp.float32),
            grid=grid,
            in_specs=[w_spec, r_spec, v_spec, v_spec],
            out_specs=v_spec,
            compiler_params=cp,
        )(self.weights, self._pack_r(r, rows), self._pack_vec(dr, rows),
          self._pack_vec(d2r, rows))
        return self._unpack_vec(out, shape)

    def evaluate_all(self, r, dr, d2r):
        """Single fused launch -> (forward, first deriv, pure second deriv)."""
        shape = r.shape
        rows, block = self._layout(shape[0] * shape[1] * shape[2])
        grid, w_spec, r_spec, v_spec, cp = self._specs(rows, block)
        k, g, h = pl.pallas_call(
            functools.partial(_all_kernel, approx=self.approx),
            out_shape=(jax.ShapeDtypeStruct((rows, _LANES), jnp.float32),
                       jax.ShapeDtypeStruct((self.ndim, rows, _LANES), jnp.float32),
                       jax.ShapeDtypeStruct((self.ndim, rows, _LANES), jnp.float32)),
            grid=grid,
            in_specs=[w_spec, r_spec, v_spec, v_spec],
            out_specs=(r_spec, v_spec, v_spec),
            compiler_params=cp,
        )(self.weights, self._pack_r(r, rows), self._pack_vec(dr, rows),
          self._pack_vec(d2r, rows))
        return (self._unpack_scalar(k, shape),
                self._unpack_vec(g, shape),
                self._unpack_vec(h, shape))


# ----------------------------------------------------------------------------
# Self-test
# ----------------------------------------------------------------------------
if __name__ == "__main__":
    key = jax.random.PRNGKey(0)
    k1, k2, k3 = jax.random.split(key, 3)

    nup, ndown = 2, 2
    nelec = nup + ndown
    natoms = 3
    nbatch = 2
    ndim = 3

    atomic_pos = jax.random.normal(k1, (natoms, ndim), dtype=jnp.float32)
    elec_pos = jax.random.normal(k2, (nbatch, nelec, ndim), dtype=jnp.float32)

    # e-n distances and spatial derivatives (plain-JAX glue, not the hot path)
    diff = elec_pos[:, :, None, :] - atomic_pos[None, None, :, :]   # (B, Ne, Na, 3)
    r = jnp.sqrt(jnp.sum(diff * diff, axis=-1))                     # (B, Ne, Na)
    r_safe = jnp.maximum(r, 1e-6)        # guard divide when electron sits on a nucleus
    dr = diff.transpose(0, 3, 1, 2) / r_safe[:, None, :, :]         # (B, 3, Ne, Na)
    d2r = jax.random.uniform(k3, (nbatch, ndim, nelec, natoms), dtype=jnp.float32)

    jastrow = JastrowKernelElectronNuclei(nup, ndown, atomic_pos, w0=1.0, w=1.0)

    ker = jax.block_until_ready(jastrow.forward(r))
    dker = jax.block_until_ready(jastrow.compute_derivative(r, dr))
    d2ker = jax.block_until_ready(jastrow.compute_second_derivative(r, dr, d2r))
    ker_f, dker_f, d2ker_f = jax.block_until_ready(jastrow.evaluate_all(r, dr, d2r))

    # ---- pure-JAX reference: exact forward + autodiff radial derivatives ----
    f_sum = lambda rr: jnp.sum(jnp.exp(rr / (1.0 + rr)))
    ref_k = jnp.exp(r / (1.0 + r))
    ref_dk = jax.grad(f_sum)(r)                                     # elementwise dK/dr
    ref_d2k = jax.grad(lambda rr: jnp.sum(jax.grad(f_sum)(rr)))(r)  # elementwise d2K/dr2
    ref_grad = ref_dk[:, None] * dr
    ref_hess = ref_d2k[:, None] * dr * dr + ref_dk[:, None] * d2r

    # tolerance relaxed for the approximate EUP reciprocal inside the kernel
    tol = dict(atol=5e-3, rtol=2e-2)
    assert ker.shape == (nbatch, nelec, natoms)
    assert dker.shape == (nbatch, ndim, nelec, natoms)
    assert d2ker.shape == (nbatch, ndim, nelec, natoms)
    assert jnp.allclose(ker, ref_k, **tol)
    assert jnp.allclose(dker, ref_grad, **tol)
    assert jnp.allclose(d2ker, ref_hess, **tol)
    assert jnp.allclose(ker_f, ker, **tol)
    assert jnp.allclose(dker_f, dker, **tol)
    assert jnp.allclose(d2ker_f, d2ker, **tol)

    print("KERNEL_OK")
</pallas_src>

<mosaic_0001>
module attributes {stable_mosaic.version = 11 : i64} {
  func.func @_fwd_kernel(%arg0: i32, %arg1: memref<2xf32, #tpu.memory_space<smem>>, %arg2: memref<8x128xf32, #tpu.memory_space<vmem>>, %arg3: memref<8x128xf32, #tpu.memory_space<vmem>>) attributes {dimension_semantics = [#tpu.dimension_semantics<parallel>], iteration_bounds = array<i64: 1>, scalar_prefetch = 0 : i64, scratch_operands = 0 : i64, tpu.core_type = #tpu.core_type<tc>, window_params = [{transform_indices = @transform_0, window_bounds = array<i64: 2>}, {transform_indices = @transform_1, window_bounds = array<i64: 8, 128>}, {transform_indices = @transform_2, window_bounds = array<i64: 8, 128>}]} {
    %c0 = arith.constant 0 : index
    %0 = memref.load %arg1[%c0] : memref<2xf32, #tpu.memory_space<smem>>
    %c1 = arith.constant 1 : index
    %1 = memref.load %arg1[%c1] : memref<2xf32, #tpu.memory_space<smem>>
    %c0_0 = arith.constant 0 : index
    %c0_1 = arith.constant 0 : index
    %2 = vector.load %arg2[%c0_0, %c0_1] : memref<8x128xf32, #tpu.memory_space<vmem>>, vector<8x128xf32>
    %3 = vector.broadcast %1 : f32 to vector<8x128xf32>
    %4 = arith.mulf %3, %2 : vector<8x128xf32>
    %cst = arith.constant 1.000000e+00 : f32
    %5 = vector.broadcast %cst : f32 to vector<8x128xf32>
    %6 = arith.addf %5, %4 : vector<8x128xf32>
    %7 = tpu.reciprocal %6 {approx = true} : vector<8x128xf32> -> vector<8x128xf32>
    %8 = vector.broadcast %0 : f32 to vector<8x128xf32>
    %9 = arith.mulf %8, %2 : vector<8x128xf32>
    %10 = arith.mulf %9, %7 : vector<8x128xf32>
    %11 = math.exp %10 : vector<8x128xf32>
    %c0_2 = arith.constant 0 : index
    %c0_3 = arith.constant 0 : index
    %12 = vector.load %arg3[%c0_2, %c0_3] : memref<8x128xf32, #tpu.memory_space<vmem>>, vector<8x128xf32>
    tpu.vector_store %arg3[%c0_2, %c0_3], %11 {strides = array<i32>} : memref<8x128xf32, #tpu.memory_space<vmem>>, vector<8x128xf32>,
    return
  }
  func.func @transform_0(%arg0: i32) -> i32 {
    %c0_i32 = arith.constant 0 : i32
    %c0_i32_0 = arith.constant 0 : i32
    return %c0_i32 : i32
  }
  func.func @transform_1(%arg0: i32) -> (i32, i32) {
    %c0_i32 = arith.constant 0 : i32
    %c0_i32_0 = arith.constant 0 : i32
    return %arg0, %c0_i32 : i32, i32
  }
  func.func @transform_2(%arg0: i32) -> (i32, i32) {
    %c0_i32 = arith.constant 0 : i32
    %c0_i32_0 = arith.constant 0 : i32
    return %arg0, %c0_i32 : i32, i32
  }
}

</mosaic_0001>

<llo_original>
// kernel: tpu_custom_call.1
$region0: #{tpu_custom_call.1}
  #allocation0 [shape = 'u32[]', space=smem, size = 0x4, offset = 0x4, fixed_abs, tag = 'smem constant byte address 0x4 - core index']
  #allocation1 [shape = 'u32[144,128]{1,0:T(1,128)}', space=vmem, size = 0x12000, scoped, tag = 'internal scratch']
  %s0 = inlined_call_operand.hbm [shape: f32[2], index: 0, kind: input, shape index: {}]
  %s1 = inlined_call_operand.hbm [shape: f32[8,128], index: 1, kind: input, shape index: {}]
  %s2 = inlined_call_operand.hbm [shape: f32[8,128], index: 2, kind: output, shape index: {}]
  %s3 = sld [smem:[#allocation0]]
  $region26: #{tpu_custom_call.1} parent=0
    _
  %s5 = ssub.s32 1, %s3
  %s6 = scalar_select 0, %s5, %s3
  $region1: #{tpu_custom_call.1} parent=0
    #allocation2 [shape = 'u8[512]{0}', space=smem, size = 0x200, scoped, tag = 'input window, operand 0, single buffered']
    #allocation3 [shape = 's32[1]{0}', space=sflag, size = 0x4, scoped, tag = 'scoped memory for tpu_custom_call.1']
    #allocation4 [shape = 's32[1]{0}', space=sflag, size = 0x4, scoped, tag = 'scoped memory for tpu_custom_call.1']
    #allocation5 [shape = 's32[1]{0}', space=sflag, size = 0x4, scoped, tag = 'scoped memory for tpu_custom_call.1']
    #allocation6 [shape = 'u8[4096]{0}', space=vmem, size = 0x1000, scoped, tag = 'input window, operand 1, single buffered']
    #allocation7 [shape = 'u8[4096]{0}', space=vmem, size = 0x1000, scoped, tag = 'output window, operand 0, single buffered']
    %7 = vsyncpa [#allocation5], 0
    %8 = vsyncpa [#allocation3], 0
    %9 = vsyncpa [#allocation4], 0
    // Predicated region
    $region2: #{tpu_custom_call.1} parent=1 // pred_check
      _
    $region3: #{tpu_custom_call.1} parent=1 // pred_check_branch
      %11 = sbr.rel (0) target = $region5
    $region4: #{tpu_custom_call.1} parent=1 // pred_region
      %s13 = ssub.s32 16, 16
      %14 = vsyncadd [#allocation5], %s13
      %17 = dma.hbm_to_smem %s0, 16, [#allocation2], [#allocation5]
    $region5: #{tpu_custom_call.1} parent=1 // pred_fallthru
      _
    // Predicated region
    $region6: #{tpu_custom_call.1} parent=1 // pred_check
      _
    $region7: #{tpu_custom_call.1} parent=1 // pred_check_branch
      %19 = sbr.rel (0) target = $region9
    $region8: #{tpu_custom_call.1} parent=1 // pred_region
      %s21 = ssub.s32 128, 128
      %22 = vsyncadd [#allocation3], %s21
      %s24 = sshll.u32 [#allocation6], 4
      %s25 = int_to_ptr.vmem [resolvable:$true] %s24
      %27 = dma.hbm_to_vmem [thread:$0]  %s1, 128, %s25, [#allocation3]
    $region9: #{tpu_custom_call.1} parent=1 // pred_fallthru
      _
    // Predicated region
    $region10: #{tpu_custom_call.1} parent=1 // pred_check
      _
    $region11: #{tpu_custom_call.1} parent=1 // pred_check_branch
      %29 = sbr.rel (0) target = $region13
    $region12: #{tpu_custom_call.1} parent=1 // pred_region
      %30 = dma.done [#allocation5], 16
    $region13: #{tpu_custom_call.1} parent=1 // pred_fallthru
      _
    // Predicated region
    $region14: #{tpu_custom_call.1} parent=1 // pred_check
      _
    $region15: #{tpu_custom_call.1} parent=1 // pred_check_branch
      %32 = sbr.rel (0) target = $region17
    $region16: #{tpu_custom_call.1} parent=1 // pred_region
      %33 = dma.done [#allocation3], 128
    $region17: #{tpu_custom_call.1} parent=1 // pred_fallthru
      _
    %34 = sfence
    %s35 = sld [smem:[#allocation2]]
    %s36 = sld [smem:[#allocation2 + $0x1]]
    %v37 = vld [vmem:[#allocation6] sm:$0xff]
    %v38 = vstv %s36
    %v39 = vmul.f32 %v38, %v37
    %v40 = vadd.f32 %v39, 1.0
    %v41 = vrcp.pop %v40
    %v42 = vstv %s35
    %v43 = vmul.f32 %v42, %v37
    %v44 = vmul.f32 %v43, %v41
    %v45 = vmul.f32 %v44, 1.442695
    %v46 = vpow.pop %v45
    %47 = vst [vmem:[#allocation7] sm:$0xff] %v46
    // Predicated region
    $region18: #{tpu_custom_call.1} parent=1 // pred_check
      _
    $region19: #{tpu_custom_call.1} parent=1 // pred_check_branch
      %49 = sbr.rel (0) target = $region21
    $region20: #{tpu_custom_call.1} parent=1 // pred_region
      %s51 = ssub.s32 128, 128
      %52 = vsyncadd [#allocation4], %s51
      %s54 = sshll.u32 [#allocation7], 4
      %s55 = int_to_ptr.vmem [resolvable:$true] %s54
      %57 = dma.vmem_to_hbm [thread:$0]  %s55, 128, %s2, [#allocation4]
    $region21: #{tpu_custom_call.1} parent=1 // pred_fallthru
      _
    // Predicated region
    $region22: #{tpu_custom_call.1} parent=1 // pred_check
      _
    $region23: #{tpu_custom_call.1} parent=1 // pred_check_branch
      %59 = sbr.rel (0) target = $region25
    $region24: #{tpu_custom_call.1} parent=1 // pred_region
      %60 = dma.done [#allocation4], 128
    $region25: #{tpu_custom_call.1} parent=1 // pred_fallthru
      _
    %61 = vsyncpa [#allocation3], 1
    %62 = vsyncpa [#allocation4], 1
    %63 = vsyncpa [#allocation5], 1

</llo_original>
